<compile_context>
chip_gen: v6e
topology: v6e:2x2x1
jax: 0.10.0
libtpu: 0.0.40
codegen_flags: <defaults>
</compile_context>

<pallas_src>
import jax
import jax.numpy as jnp
from jax.experimental import pallas as pl
from jax.experimental.pallas import tpu as pltpu

NORM_EPS = 1e-12   # F.normalize default eps
BN_EPS = 1e-5      # nn.BatchNorm3d default eps
VAR_EPS = 1e-12    # guard for rsqrt / 1/var on zero-variance (e.g. padded) channels


# --------------------------------------------------------------------------- #
# Hardware / tiling helpers
# --------------------------------------------------------------------------- #
def _vmem_capacity_bytes():
    """Physical VMEM per core; conservative 64 MiB (v7x) if the query fails."""
    cap = None
    try:
        info = pltpu.get_tpu_info()
        cap = getattr(info, "vmem_capacity_bytes", None)
    except Exception:
        cap = None
    if not cap:
        cap = 64 * 1024 * 1024
    return int(min(int(cap), 128 * 1024 * 1024))


def _vmem_limit_bytes(cap):
    # Leave ~15% headroom for Mosaic internal scratch / second pipeline buffers:
    #   v7x (64 MiB physical)  -> ~54 MiB limit
    #   v5e/v6e (128 MiB)      -> ~108 MiB limit (keeps larger N on the fused path)
    return int(cap * 0.85)


def _pick_n_tile(n, c, io_bytes, requested=None, target_bytes=2 * 1024 * 1024):
    """Pick a 128-aligned divisor of N giving ~target_bytes per x block."""
    if requested is None:
        target = max(128, (target_bytes // max(c * io_bytes, 1)) // 128 * 128)
    else:
        target = max(128, int(requested))
    if n <= target:
        return n
    t = (min(target, n) // 128) * 128
    while t >= 128:
        if n % t == 0:
            return t
        t -= 128
    # No 128-aligned divisor of N: fall back to a single full-N tile.
    return n


# --------------------------------------------------------------------------- #
# Kernels
# --------------------------------------------------------------------------- #
def _sta_fused_kernel(x_ref, wd_ref, bd_ref, wu_ref, bu_ref, o_ref):
    """Small-problem path: whole (C, N) slab resident, 1 HBM read + 1 write."""
    x = x_ref[0].astype(jnp.float32)                                     # (C, N)

    # down_channel: 1x1x1 Conv3d == Wd @ x + bd -> (CIP, N)
    z = jnp.dot(wd_ref[...], x, preferred_element_type=jnp.float32) + bd_ref[...]
    n = z.shape[1]
    inv_n = 1.0 / n

    # get_moments(moments=[1,2,4,5,6], moment_norm=True) — single fused pass.
    mean = jnp.sum(z, axis=1, keepdims=True) * inv_n                     # (CIP, 1)
    zc = z - mean
    zc2 = zc * zc
    zc3 = zc2 * zc
    var = jnp.sum(zc2, axis=1, keepdims=True) * inv_n
    std = jnp.sqrt(var)                                                  # sqrt'd variance
    inv_std = jax.lax.rsqrt(jnp.maximum(var, VAR_EPS))                   # eps-guarded
    is2 = inv_std * inv_std
    is4 = is2 * is2
    m4 = (jnp.sum(zc2 * zc2, axis=1, keepdims=True) * inv_n) * is4
    m5 = (jnp.sum(zc2 * zc3, axis=1, keepdims=True) * inv_n) * (is4 * inv_std)
    m6 = (jnp.sum(zc3 * zc3, axis=1, keepdims=True) * inv_n) * (is4 * is2)
    moms = (mean, std, m4, m5, m6)

    # sta_distribute: F.normalize over channels (per moment) + softmax over moments.
    mv = []
    for mom in moms:
        nrm = jnp.sqrt(jnp.sum(mom * mom, axis=0, keepdims=True))
        mv.append(mom / jnp.maximum(nrm, NORM_EPS))                      # (CIP, 1)

    f = [jnp.sum(z * v, axis=0, keepdims=True) for v in mv]              # 5 x (1, N)
    fmax = f[0]
    for fm in f[1:]:
        fmax = jnp.maximum(fmax, fm)
    fe = [jnp.exp(fm - fmax) for fm in f]
    fsum = fe[0]
    for e in fe[1:]:
        fsum = fsum + e
    r = pl.reciprocal(fsum, approx=True)                                 # EUP
    inv_fsum = r * (2.0 - fsum * r)                                      # one Newton step

    attn = mv[0] * (fe[0] * inv_fsum)
    for v, e in zip(mv[1:], fe[1:]):
        attn = attn + v * (e * inv_fsum)                                 # (CIP, N)

    # up_channel (BatchNorm folded) + residual + ReLU
    u = jnp.dot(wu_ref[...], attn, preferred_element_type=jnp.float32) + bu_ref[...]
    o_ref[0] = jnp.maximum(u + x, 0.0).astype(o_ref.dtype)


def _sta_stats_kernel(x_ref, wd_ref, bd_ref, s_ref):
    """Tiled phase 1: per-tile raw power sums S_k = sum_n z^k, k = 1..6."""
    x = x_ref[0].astype(jnp.float32)                                     # (C, TN)
    z = jnp.dot(wd_ref[...], x, preferred_element_type=jnp.float32) + bd_ref[...]  # (CIP, TN)
    z2 = z * z
    z3 = z2 * z
    s1 = jnp.sum(z, axis=1, keepdims=True)
    s2 = jnp.sum(z2, axis=1, keepdims=True)
    s3 = jnp.sum(z3, axis=1, keepdims=True)
    s4 = jnp.sum(z2 * z2, axis=1, keepdims=True)
    s5 = jnp.sum(z2 * z3, axis=1, keepdims=True)
    s6 = jnp.sum(z3 * z3, axis=1, keepdims=True)
    # Pack the six (CIP, 1) sums into lanes 0..5 of a (CIP, 8) tile.
    col = jax.lax.broadcasted_iota(jnp.int32, (z.shape[0], 8), 1)
    s_ref[0, 0] = (jnp.where(col == 0, s1, 0.0) + jnp.where(col == 1, s2, 0.0)
                   + jnp.where(col == 2, s3, 0.0) + jnp.where(col == 3, s4, 0.0)
                   + jnp.where(col == 4, s5, 0.0) + jnp.where(col == 5, s6, 0.0))


def _sta_apply_kernel(x_ref, wd_ref, bd_ref, mv_ref, mvt_ref, wu_ref, bu_ref, o_ref):
    """Tiled phase 2: recompute z, softmax over moments (MXU), project up."""
    x = x_ref[0].astype(jnp.float32)                                     # (C, TN)
    z = jnp.dot(wd_ref[...], x, preferred_element_type=jnp.float32) + bd_ref[...]  # (CIP, TN)

    mv = mv_ref[0]                                                       # (5, CIP)
    f = jnp.dot(mv, z, preferred_element_type=jnp.float32)               # (5, TN) on the MXU
    fmax = jnp.max(f, axis=0, keepdims=True)
    fe = jnp.exp(f - fmax)
    fsum = jnp.sum(fe, axis=0, keepdims=True)
    r = pl.reciprocal(fsum, approx=True)
    p = fe * (r * (2.0 - fsum * r))                                      # softmax, (5, TN)

    attn = jnp.dot(mvt_ref[0], p, preferred_element_type=jnp.float32)    # (CIP, TN) on the MXU
    u = jnp.dot(wu_ref[...], attn, preferred_element_type=jnp.float32) + bu_ref[...]
    o_ref[0] = jnp.maximum(u + x, 0.0).astype(o_ref.dtype)


# --------------------------------------------------------------------------- #
# Host-side tiny math (between the two tiled kernels)
# --------------------------------------------------------------------------- #
def _moment_vectors(power_sums, n, ci):
    """(B, CIP, 8) raw power sums -> normalized moment matrix mv (B, 5, CIP)."""
    inv_n = 1.0 / n
    m1, m2, m3, m4r, m5r, m6r = (power_sums[..., k] * inv_n for k in range(6))
    mu = m1
    mu2, mu3 = mu * mu, mu * mu * mu
    # Central moments via binomial expansion of the raw moments.
    c2 = m2 - mu2
    c4 = m4r - 4.0 * mu * m3 + 6.0 * mu2 * m2 - 3.0 * mu2 * mu2
    c5 = m5r - 5.0 * mu * m4r + 10.0 * mu2 * m3 - 10.0 * mu3 * m2 + 4.0 * mu3 * mu2
    c6 = (m6r - 6.0 * mu * m5r + 15.0 * mu2 * m4r - 20.0 * mu3 * m3
          + 15.0 * mu2 * mu2 * m2 - 5.0 * mu3 * mu3)
    var = jnp.maximum(c2, 0.0)
    std = jnp.sqrt(var)
    inv_var = 1.0 / jnp.maximum(var, VAR_EPS)
    inv_std = jnp.sqrt(inv_var)
    m4 = c4 * inv_var * inv_var
    m5 = c5 * inv_var * inv_var * inv_std
    m6 = c6 * inv_var * inv_var * inv_var
    y = jnp.stack([mu, std, m4, m5, m6], axis=1)                         # (B, 5, CIP)
    mask = (jnp.arange(y.shape[-1]) < ci).astype(y.dtype)                # zero the pad channels
    y = y * mask
    nrm = jnp.sqrt(jnp.sum(y * y, axis=-1, keepdims=True))               # F.normalize over channels
    return y / jnp.maximum(nrm, NORM_EPS)


# --------------------------------------------------------------------------- #
# Wrapper
# --------------------------------------------------------------------------- #
def statistic_attention_block(x, params, *, io_dtype=None, n_tile=None,
                              force_tiled=False):
    """x: (b, c, t, h, w) float32  ->  (b, c, t, h, w) (inference BatchNorm)."""
    b, c, t, h, w = x.shape
    n = t * h * w
    ci = params["wd"].shape[0]
    cip = max(8, -(-ci // 8) * 8)              # pad inter-channels to full 8-sublane vregs
    io_dtype = jnp.float32 if io_dtype is None else io_dtype
    io_bytes = jnp.dtype(io_dtype).itemsize

    # Fold inference BatchNorm3d into the up-channel conv (host side, tiny).
    scale = params["gamma"] * jax.lax.rsqrt(params["rvar"] + BN_EPS)     # (C,)
    wu_f = params["wu"] * scale[:, None]                                 # (C, CI)
    bu_f = (params["bu"] - params["rmean"]) * scale + params["beta"]     # (C,)

    # Zero-pad the inter-channel axis to CIP.  Pad rows of Wd / cols of Wu are
    # exact zeros -> zero moments, zero attention contribution.
    wd_p = jnp.zeros((cip, c), jnp.float32).at[:ci].set(params["wd"])
    bd_p = jnp.zeros((cip, 1), jnp.float32).at[:ci, 0].set(params["bd"])
    wu_p = jnp.zeros((c, cip), jnp.float32).at[:, :ci].set(wu_f)
    bu_p = bu_f.reshape(c, 1)

    x_flat = x.reshape(b, c, n).astype(io_dtype)     # free reshape; optional bf16 boundary

    cap = _vmem_capacity_bytes()
    vmem_limit = _vmem_limit_bytes(cap)

    # Fused-path VMEM estimate: double-buffered x/out slabs + f32 copy + ~6 (CIP,N) temps.
    fused_bytes = 4 * c * n * io_bytes + c * n * 4 + 6 * cip * n * 4
    use_fused = ((not force_tiled)
                 and fused_bytes <= int(0.6 * cap)
                 and (b >= 2 or n <= 4096))          # at b==1 prefer the tiled grid (megacore)

    cparams_1d = pltpu.CompilerParams(dimension_semantics=("parallel",),
                                      vmem_limit_bytes=vmem_limit)
    cparams_2d = pltpu.CompilerParams(dimension_semantics=("parallel", "parallel"),
                                      vmem_limit_bytes=vmem_limit)

    if use_fused:
        cost = pl.CostEstimate(
            flops=b * n * (4 * c * cip + 40 * cip + 24),
            transcendentals=b * n * 6,
            bytes_accessed=2 * b * c * n * io_bytes + (2 * c * cip + c + cip) * 4)
        out = pl.pallas_call(
            _sta_fused_kernel,
            out_shape=jax.ShapeDtypeStruct((b, c, n), io_dtype),
            grid_spec=pltpu.PrefetchScalarGridSpec(
                num_scalar_prefetch=0,
                grid=(b,),
                in_specs=[
                    pl.BlockSpec((1, c, n), lambda i: (i, 0, 0)),    # x
                    pl.BlockSpec((cip, c), lambda i: (0, 0)),        # Wd (padded)
                    pl.BlockSpec((cip, 1), lambda i: (0, 0)),        # bd
                    pl.BlockSpec((c, cip), lambda i: (0, 0)),        # Wu (BN folded, padded)
                    pl.BlockSpec((c, 1), lambda i: (0, 0)),          # bu (BN folded)
                ],
                out_specs=pl.BlockSpec((1, c, n), lambda i: (i, 0, 0)),
            ),
            compiler_params=cparams_1d,
            cost_estimate=cost,
        )(x_flat, wd_p, bd_p, wu_p, bu_p)
        return out.reshape(b, c, t, h, w)

    # ---------------- tiled two-phase path ----------------
    tn = _pick_n_tile(n, c, io_bytes, requested=n_tile)
    nt = n // tn

    stats_cost = pl.CostEstimate(
        flops=b * n * (2 * c * cip + 12 * cip),
        transcendentals=0,
        bytes_accessed=b * c * n * io_bytes + b * nt * cip * 8 * 4)
    power_sums = pl.pallas_call(
        _sta_stats_kernel,
        out_shape=jax.ShapeDtypeStruct((b, nt, cip, 8), jnp.float32),
        grid_spec=pltpu.PrefetchScalarGridSpec(
            num_scalar_prefetch=0,
            grid=(b, nt),
            in_specs=[
                pl.BlockSpec((1, c, tn), lambda i, j: (i, 0, j)),    # x tile
                pl.BlockSpec((cip, c), lambda i, j: (0, 0)),         # Wd
                pl.BlockSpec((cip, 1), lambda i, j: (0, 0)),         # bd
            ],
            out_specs=pl.BlockSpec((1, 1, cip, 8), lambda i, j: (i, j, 0, 0)),
        ),
        compiler_params=cparams_2d,
        cost_estimate=stats_cost,
    )(x_flat, wd_p, bd_p)

    # Tiny host step: combine partial sums, convert to normalized moment vectors.
    mv = _moment_vectors(jnp.sum(power_sums, axis=1), n, ci)             # (B, 5, CIP)
    mvt = jnp.swapaxes(mv, 1, 2)                                         # (B, CIP, 5)

    apply_cost = pl.CostEstimate(
        flops=b * n * (4 * c * cip + 20 * cip + 30),
        transcendentals=b * n * 6,
        bytes_accessed=2 * b * c * n * io_bytes + b * 10 * cip * 4)
    out = pl.pallas_call(
        _sta_apply_kernel,
        out_shape=jax.ShapeDtypeStruct((b, c, n), io_dtype),
        grid_spec=pltpu.PrefetchScalarGridSpec(
            num_scalar_prefetch=0,
            grid=(b, nt),
            in_specs=[
                pl.BlockSpec((1, c, tn), lambda i, j: (i, 0, j)),    # x tile
                pl.BlockSpec((cip, c), lambda i, j: (0, 0)),         # Wd
                pl.BlockSpec((cip, 1), lambda i, j: (0, 0)),         # bd
                pl.BlockSpec((1, 5, cip), lambda i, j: (i, 0, 0)),   # Mv  (5, CIP)
                pl.BlockSpec((1, cip, 5), lambda i, j: (i, 0, 0)),   # Mv^T
                pl.BlockSpec((c, cip), lambda i, j: (0, 0)),         # Wu (BN folded)
                pl.BlockSpec((c, 1), lambda i, j: (0, 0)),           # bu (BN folded)
            ],
            out_specs=pl.BlockSpec((1, c, tn), lambda i, j: (i, 0, j)),
        ),
        compiler_params=cparams_2d,
        cost_estimate=apply_cost,
    )(x_flat, wd_p, bd_p, mv, mvt, wu_p, bu_p)
    return out.reshape(b, c, t, h, w)


# --------------------------------------------------------------------------- #
# Pure-JAX reference and parameter construction
# --------------------------------------------------------------------------- #
def reference_forward(x, params):
    """Pure-JAX reference mirroring the PyTorch module (inference BN, unfolded)."""
    b, c, t, h, w = x.shape
    n = t * h * w
    xf = x.reshape(b, c, n)
    z = jnp.einsum("dc,bcn->bdn", params["wd"], xf) + params["bd"].reshape(1, -1, 1)

    mean = jnp.mean(z, axis=-1, keepdims=True)
    zc = z - mean
    var = jnp.mean(zc ** 2, axis=-1, keepdims=True)
    std = jnp.sqrt(var)
    m4 = jnp.mean(zc ** 4, axis=-1, keepdims=True) / std ** 4
    m5 = jnp.mean(zc ** 5, axis=-1, keepdims=True) / std ** 5
    m6 = jnp.mean(zc ** 6, axis=-1, keepdims=True) / std ** 6
    y = jnp.concatenate([mean, std, m4, m5, m6], axis=2)                 # (b, ci, 5)

    nrm = jnp.sqrt(jnp.sum(y * y, axis=1, keepdims=True))
    mv = y / jnp.maximum(nrm, NORM_EPS)

    zt = jnp.transpose(z, (0, 2, 1))                                     # (b, n, ci)
    f = jnp.einsum("bnc,bcm->bnm", zt, mv)
    f = jax.nn.softmax(f, axis=-1)
    a = jnp.einsum("bnm,bcm->bnc", f, mv)
    a = jnp.transpose(a, (0, 2, 1))                                      # (b, ci, n)

    u = jnp.einsum("cd,bdn->bcn", params["wu"], a) + params["bu"].reshape(1, -1, 1)
    u = ((u - params["rmean"].reshape(1, -1, 1))
         * jax.lax.rsqrt(params["rvar"].reshape(1, -1, 1) + BN_EPS)
         * params["gamma"].reshape(1, -1, 1)
         + params["beta"].reshape(1, -1, 1))
    return jnp.maximum(u + xf, 0.0).reshape(b, c, t, h, w)


def make_params(key, c, ci, gamma_value):
    k1, k2 = jax.random.split(key)
    # kaiming_normal_ on 1x1x1 Conv3d weights (fan_in, gain=sqrt(2)); biases zeroed.
    wd = jax.random.normal(k1, (ci, c), jnp.float32) * jnp.sqrt(2.0 / c)     # (out=CI, in=C)
    wu = jax.random.normal(k2, (c, ci), jnp.float32) * jnp.sqrt(2.0 / ci)    # (out=C, in=CI)
    return {
        "wd": wd,
        "bd": jnp.zeros((ci,), jnp.float32),
        "wu": wu,
        "bu": jnp.zeros((c,), jnp.float32),
        "gamma": jnp.full((c,), gamma_value, jnp.float32),  # module init sets BN weight to 0
        "beta": jnp.zeros((c,), jnp.float32),
        "rmean": jnp.zeros((c,), jnp.float32),
        "rvar": jnp.ones((c,), jnp.float32),
    }


if __name__ == "__main__":
    B, C, T, H, W = 2, 16, 4, 8, 8          # in_dim=16 -> inter_dim=4, N = 256
    CI = C // 4

    key = jax.random.PRNGKey(0)
    kx, kp = jax.random.split(key)
    x = jax.random.normal(kx, (B, C, T, H, W), jnp.float32)

    # 1) Full compute path (non-zero BN gamma exercises the BN folding), fused path.
    params_chk = make_params(kp, C, CI, gamma_value=1.0)
    ref_chk = reference_forward(x, params_chk)
    out_fused = statistic_attention_block(x, params_chk)
    jax.block_until_ready(out_fused)
    assert jnp.allclose(out_fused, ref_chk, rtol=2e-3, atol=2e-3), "fused-path mismatch"

    # 2) Tiled two-phase path (stats kernel + apply kernel, N split into 128-lane tiles).
    out_tiled = statistic_attention_block(x, params_chk, force_tiled=True, n_tile=128)
    jax.block_until_ready(out_tiled)
    assert jnp.allclose(out_tiled, ref_chk, rtol=2e-3, atol=2e-3), "tiled-path mismatch"

    # 3) bf16 HBM boundary on the tiled path (f32 accumulation inside the kernels).
    out_bf16 = statistic_attention_block(x, params_chk, io_dtype=jnp.bfloat16,
                                         force_tiled=True, n_tile=128)
    jax.block_until_ready(out_bf16)
    assert jnp.allclose(out_bf16.astype(jnp.float32), ref_chk, rtol=5e-2, atol=5e-2), \
        "bf16 tiled-path mismatch"

    # 4) Module-faithful init (BatchNorm weight/bias are zero-initialized in __init__).
    params = make_params(kp, C, CI, gamma_value=0.0)
    out = statistic_attention_block(x, params)
    jax.block_until_ready(out)
    ref = reference_forward(x, params)
    assert jnp.allclose(out, ref, rtol=2e-3, atol=2e-3), "module-init mismatch"

    print("KERNEL_OK")
</pallas_src>

<mosaic_0001>
module attributes {stable_mosaic.version = 11 : i64} {
  func.func @_sta_fused_kernel(%arg0: i32, %arg1: memref<1x16x256xf32, #tpu.memory_space<vmem>>, %arg2: memref<8x16xf32, #tpu.memory_space<vmem>>, %arg3: memref<8x1xf32, #tpu.memory_space<vmem>>, %arg4: memref<16x8xf32, #tpu.memory_space<vmem>>, %arg5: memref<16x1xf32, #tpu.memory_space<vmem>>, %arg6: memref<1x16x256xf32, #tpu.memory_space<vmem>>) attributes {dimension_semantics = [#tpu.dimension_semantics<parallel>], iteration_bounds = array<i64: 2>, scalar_prefetch = 0 : i64, scratch_operands = 0 : i64, tpu.core_type = #tpu.core_type<tc>, window_params = [{transform_indices = @transform_0, window_bounds = array<i64: 1, 16, 256>}, {pipeline_mode = #tpu.pipeline_mode<synchronous>, transform_indices = @transform_1, window_bounds = array<i64: 8, 16>}, {pipeline_mode = #tpu.pipeline_mode<synchronous>, transform_indices = @transform_2, window_bounds = array<i64: 8, 1>}, {pipeline_mode = #tpu.pipeline_mode<synchronous>, transform_indices = @transform_3, window_bounds = array<i64: 16, 8>}, {pipeline_mode = #tpu.pipeline_mode<synchronous>, transform_indices = @transform_4, window_bounds = array<i64: 16, 1>}, {transform_indices = @transform_5, window_bounds = array<i64: 1, 16, 256>}]} {
    %c0 = arith.constant 0 : index
    %c0_0 = arith.constant 0 : index
    %c0_1 = arith.constant 0 : index
    %0 = vector.load %arg1[%c0, %c0_0, %c0_1] : memref<1x16x256xf32, #tpu.memory_space<vmem>>, vector<1x16x256xf32>
    %1 = vector.shape_cast %0 : vector<1x16x256xf32> to vector<16x256xf32>
    %c0_2 = arith.constant 0 : index
    %c0_3 = arith.constant 0 : index
    %2 = vector.load %arg2[%c0_2, %c0_3] : memref<8x16xf32, #tpu.memory_space<vmem>>, vector<8x16xf32>
    %cst = arith.constant dense<0.000000e+00> : vector<8x256xf32>
    %3 = tpu.matmul %2, %1, %cst {dimension_numbers = #tpu.dot_dimension_numbers<[1], [0], [0], [1], [0, 0, 1, 1], [], []>} : vector<8x16xf32>, vector<16x256xf32>, vector<8x256xf32> -> vector<8x256xf32>
    %c0_4 = arith.constant 0 : index
    %c0_5 = arith.constant 0 : index
    %4 = vector.load %arg3[%c0_4, %c0_5] : memref<8x1xf32, #tpu.memory_space<vmem>>, vector<8x1xf32>
    %5 = vector.broadcast %4 : vector<8x1xf32> to vector<8x256xf32>
    %6 = arith.addf %3, %5 : vector<8x256xf32>
    %cst_6 = arith.constant dense<0.000000e+00> : vector<8xf32>
    %7 = vector.multi_reduction <add>, %6, %cst_6 [1] : vector<8x256xf32> to vector<8xf32>
    %8 = vector.shape_cast %7 : vector<8xf32> to vector<8x1xf32>
    %cst_7 = arith.constant 3.906250e-03 : f32
    %9 = vector.broadcast %cst_7 : f32 to vector<8x1xf32>
    %10 = arith.mulf %8, %9 : vector<8x1xf32>
    %11 = vector.broadcast %10 : vector<8x1xf32> to vector<8x256xf32>
    %12 = arith.subf %6, %11 : vector<8x256xf32>
    %13 = arith.mulf %12, %12 : vector<8x256xf32>
    %14 = arith.mulf %13, %12 : vector<8x256xf32>
    %cst_8 = arith.constant dense<0.000000e+00> : vector<8xf32>
    %15 = vector.multi_reduction <add>, %13, %cst_8 [1] : vector<8x256xf32> to vector<8xf32>
    %16 = vector.shape_cast %15 : vector<8xf32> to vector<8x1xf32>
    %cst_9 = arith.constant 3.906250e-03 : f32
    %17 = vector.broadcast %cst_9 : f32 to vector<8x1xf32>
    %18 = arith.mulf %16, %17 : vector<8x1xf32>
    %19 = math.sqrt %18 : vector<8x1xf32>
    %cst_10 = arith.constant 9.99999996E-13 : f32
    %20 = vector.broadcast %cst_10 : f32 to vector<8x1xf32>
    %21 = arith.maximumf %18, %20 : vector<8x1xf32>
    %22 = math.rsqrt %21 : vector<8x1xf32>
    %23 = arith.mulf %22, %22 : vector<8x1xf32>
    %24 = arith.mulf %23, %23 : vector<8x1xf32>
    %25 = arith.mulf %13, %13 : vector<8x256xf32>
    %cst_11 = arith.constant dense<0.000000e+00> : vector<8xf32>
    %26 = vector.multi_reduction <add>, %25, %cst_11 [1] : vector<8x256xf32> to vector<8xf32>
    %27 = vector.shape_cast %26 : vector<8xf32> to vector<8x1xf32>
    %cst_12 = arith.constant 3.906250e-03 : f32
    %28 = vector.broadcast %cst_12 : f32 to vector<8x1xf32>
    %29 = arith.mulf %27, %28 : vector<8x1xf32>
    %30 = arith.mulf %29, %24 : vector<8x1xf32>
    %31 = arith.mulf %13, %14 : vector<8x256xf32>
    %cst_13 = arith.constant dense<0.000000e+00> : vector<8xf32>
    %32 = vector.multi_reduction <add>, %31, %cst_13 [1] : vector<8x256xf32> to vector<8xf32>
    %33 = vector.shape_cast %32 : vector<8xf32> to vector<8x1xf32>
    %cst_14 = arith.constant 3.906250e-03 : f32
    %34 = vector.broadcast %cst_14 : f32 to vector<8x1xf32>
    %35 = arith.mulf %33, %34 : vector<8x1xf32>
    %36 = arith.mulf %24, %22 : vector<8x1xf32>
    %37 = arith.mulf %35, %36 : vector<8x1xf32>
    %38 = arith.mulf %14, %14 : vector<8x256xf32>
    %cst_15 = arith.constant dense<0.000000e+00> : vector<8xf32>
    %39 = vector.multi_reduction <add>, %38, %cst_15 [1] : vector<8x256xf32> to vector<8xf32>
    %40 = vector.shape_cast %39 : vector<8xf32> to vector<8x1xf32>
    %cst_16 = arith.constant 3.906250e-03 : f32
    %41 = vector.broadcast %cst_16 : f32 to vector<8x1xf32>
    %42 = arith.mulf %40, %41 : vector<8x1xf32>
    %43 = arith.mulf %24, %23 : vector<8x1xf32>
    %44 = arith.mulf %42, %43 : vector<8x1xf32>
    %45 = arith.mulf %10, %10 : vector<8x1xf32>
    %cst_17 = arith.constant dense<0.000000e+00> : vector<1xf32>
    %46 = vector.multi_reduction <add>, %45, %cst_17 [0] : vector<8x1xf32> to vector<1xf32>
    %47 = vector.shape_cast %46 : vector<1xf32> to vector<1x1xf32>
    %48 = math.sqrt %47 : vector<1x1xf32>
    %cst_18 = arith.constant 9.99999996E-13 : f32
    %49 = vector.broadcast %cst_18 : f32 to vector<1x1xf32>
    %50 = arith.maximumf %48, %49 : vector<1x1xf32>
    %51 = vector.broadcast %50 : vector<1x1xf32> to vector<8x1xf32>
    %52 = arith.divf %10, %51 : vector<8x1xf32>
    %53 = arith.mulf %19, %19 : vector<8x1xf32>
    %cst_19 = arith.constant dense<0.000000e+00> : vector<1xf32>
    %54 = vector.multi_reduction <add>, %53, %cst_19 [0] : vector<8x1xf32> to vector<1xf32>
    %55 = vector.shape_cast %54 : vector<1xf32> to vector<1x1xf32>
    %56 = math.sqrt %55 : vector<1x1xf32>
    %cst_20 = arith.constant 9.99999996E-13 : f32
    %57 = vector.broadcast %cst_20 : f32 to vector<1x1xf32>
    %58 = arith.maximumf %56, %57 : vector<1x1xf32>
    %59 = vector.broadcast %58 : vector<1x1xf32> to vector<8x1xf32>
    %60 = arith.divf %19, %59 : vector<8x1xf32>
    %61 = arith.mulf %30, %30 : vector<8x1xf32>
    %cst_21 = arith.constant dense<0.000000e+00> : vector<1xf32>
    %62 = vector.multi_reduction <add>, %61, %cst_21 [0] : vector<8x1xf32> to vector<1xf32>
    %63 = vector.shape_cast %62 : vector<1xf32> to vector<1x1xf32>
    %64 = math.sqrt %63 : vector<1x1xf32>
    %cst_22 = arith.constant 9.99999996E-13 : f32
    %65 = vector.broadcast %cst_22 : f32 to vector<1x1xf32>
    %66 = arith.maximumf %64, %65 : vector<1x1xf32>
    %67 = vector.broadcast %66 : vector<1x1xf32> to vector<8x1xf32>
    %68 = arith.divf %30, %67 : vector<8x1xf32>
    %69 = arith.mulf %37, %37 : vector<8x1xf32>
    %cst_23 = arith.constant dense<0.000000e+00> : vector<1xf32>
    %70 = vector.multi_reduction <add>, %69, %cst_23 [0] : vector<8x1xf32> to vector<1xf32>
    %71 = vector.shape_cast %70 : vector<1xf32> to vector<1x1xf32>
    %72 = math.sqrt %71 : vector<1x1xf32>
    %cst_24 = arith.constant 9.99999996E-13 : f32
    %73 = vector.broadcast %cst_24 : f32 to vector<1x1xf32>
    %74 = arith.maximumf %72, %73 : vector<1x1xf32>
    %75 = vector.broadcast %74 : vector<1x1xf32> to vector<8x1xf32>
    %76 = arith.divf %37, %75 : vector<8x1xf32>
    %77 = arith.mulf %44, %44 : vector<8x1xf32>
    %cst_25 = arith.constant dense<0.000000e+00> : vector<1xf32>
    %78 = vector.multi_reduction <add>, %77, %cst_25 [0] : vector<8x1xf32> to vector<1xf32>
    %79 = vector.shape_cast %78 : vector<1xf32> to vector<1x1xf32>
    %80 = math.sqrt %79 : vector<1x1xf32>
    %cst_26 = arith.constant 9.99999996E-13 : f32
    %81 = vector.broadcast %cst_26 : f32 to vector<1x1xf32>
    %82 = arith.maximumf %80, %81 : vector<1x1xf32>
    %83 = vector.broadcast %82 : vector<1x1xf32> to vector<8x1xf32>
    %84 = arith.divf %44, %83 : vector<8x1xf32>
    %85 = vector.broadcast %52 : vector<8x1xf32> to vector<8x256xf32>
    %86 = arith.mulf %6, %85 : vector<8x256xf32>
    %cst_27 = arith.constant dense<0.000000e+00> : vector<256xf32>
    %87 = vector.multi_reduction <add>, %86, %cst_27 [0] : vector<8x256xf32> to vector<256xf32>
    %88 = vector.shape_cast %87 : vector<256xf32> to vector<1x256xf32>
    %89 = vector.broadcast %60 : vector<8x1xf32> to vector<8x256xf32>
    %90 = arith.mulf %6, %89 : vector<8x256xf32>
    %cst_28 = arith.constant dense<0.000000e+00> : vector<256xf32>
    %91 = vector.multi_reduction <add>, %90, %cst_28 [0] : vector<8x256xf32> to vector<256xf32>
    %92 = vector.shape_cast %91 : vector<256xf32> to vector<1x256xf32>
    %93 = vector.broadcast %68 : vector<8x1xf32> to vector<8x256xf32>
    %94 = arith.mulf %6, %93 : vector<8x256xf32>
    %cst_29 = arith.constant dense<0.000000e+00> : vector<256xf32>
    %95 = vector.multi_reduction <add>, %94, %cst_29 [0] : vector<8x256xf32> to vector<256xf32>
    %96 = vector.shape_cast %95 : vector<256xf32> to vector<1x256xf32>
    %97 = vector.broadcast %76 : vector<8x1xf32> to vector<8x256xf32>
    %98 = arith.mulf %6, %97 : vector<8x256xf32>
    %cst_30 = arith.constant dense<0.000000e+00> : vector<256xf32>
    %99 = vector.multi_reduction <add>, %98, %cst_30 [0] : vector<8x256xf32> to vector<256xf32>
    %100 = vector.shape_cast %99 : vector<256xf32> to vector<1x256xf32>
    %101 = vector.broadcast %84 : vector<8x1xf32> to vector<8x256xf32>
    %102 = arith.mulf %6, %101 : vector<8x256xf32>
    %cst_31 = arith.constant dense<0.000000e+00> : vector<256xf32>
    %103 = vector.multi_reduction <add>, %102, %cst_31 [0] : vector<8x256xf32> to vector<256xf32>
    %104 = vector.shape_cast %103 : vector<256xf32> to vector<1x256xf32>
    %105 = arith.maximumf %88, %92 : vector<1x256xf32>
    %106 = arith.maximumf %105, %96 : vector<1x256xf32>
    %107 = arith.maximumf %106, %100 : vector<1x256xf32>
    %108 = arith.maximumf %107, %104 : vector<1x256xf32>
    %109 = arith.subf %88, %108 : vector<1x256xf32>
    %110 = math.exp %109 : vector<1x256xf32>
    %111 = arith.subf %92, %108 : vector<1x256xf32>
    %112 = math.exp %111 : vector<1x256xf32>
    %113 = arith.subf %96, %108 : vector<1x256xf32>
    %114 = math.exp %113 : vector<1x256xf32>
    %115 = arith.subf %100, %108 : vector<1x256xf32>
    %116 = math.exp %115 : vector<1x256xf32>
    %117 = arith.subf %104, %108 : vector<1x256xf32>
    %118 = math.exp %117 : vector<1x256xf32>
    %119 = arith.addf %110, %112 : vector<1x256xf32>
    %120 = arith.addf %119, %114 : vector<1x256xf32>
    %121 = arith.addf %120, %116 : vector<1x256xf32>
    %122 = arith.addf %121, %118 : vector<1x256xf32>
    %123 = tpu.reciprocal %122 {approx = true} : vector<1x256xf32> -> vector<1x256xf32>
    %124 = arith.mulf %122, %123 : vector<1x256xf32>
    %cst_32 = arith.constant 2.000000e+00 : f32
    %125 = vector.broadcast %cst_32 : f32 to vector<1x256xf32>
    %126 = arith.subf %125, %124 : vector<1x256xf32>
    %127 = arith.mulf %123, %126 : vector<1x256xf32>
    %128 = arith.mulf %110, %127 : vector<1x256xf32>
    %129 = vector.broadcast %52 : vector<8x1xf32> to vector<8x256xf32>
    %130 = vector.broadcast %128 : vector<1x256xf32> to vector<8x256xf32>
    %131 = arith.mulf %129, %130 : vector<8x256xf32>
    %132 = arith.mulf %112, %127 : vector<1x256xf32>
    %133 = vector.broadcast %60 : vector<8x1xf32> to vector<8x256xf32>
    %134 = vector.broadcast %132 : vector<1x256xf32> to vector<8x256xf32>
    %135 = arith.mulf %133, %134 : vector<8x256xf32>
    %136 = arith.addf %131, %135 : vector<8x256xf32>
    %137 = arith.mulf %114, %127 : vector<1x256xf32>
    %138 = vector.broadcast %68 : vector<8x1xf32> to vector<8x256xf32>
    %139 = vector.broadcast %137 : vector<1x256xf32> to vector<8x256xf32>
    %140 = arith.mulf %138, %139 : vector<8x256xf32>
    %141 = arith.addf %136, %140 : vector<8x256xf32>
    %142 = arith.mulf %116, %127 : vector<1x256xf32>
    %143 = vector.broadcast %76 : vector<8x1xf32> to vector<8x256xf32>
    %144 = vector.broadcast %142 : vector<1x256xf32> to vector<8x256xf32>
    %145 = arith.mulf %143, %144 : vector<8x256xf32>
    %146 = arith.addf %141, %145 : vector<8x256xf32>
    %147 = arith.mulf %118, %127 : vector<1x256xf32>
    %148 = vector.broadcast %84 : vector<8x1xf32> to vector<8x256xf32>
    %149 = vector.broadcast %147 : vector<1x256xf32> to vector<8x256xf32>
    %150 = arith.mulf %148, %149 : vector<8x256xf32>
    %151 = arith.addf %146, %150 : vector<8x256xf32>
    %c0_33 = arith.constant 0 : index
    %c0_34 = arith.constant 0 : index
    %152 = vector.load %arg4[%c0_33, %c0_34] : memref<16x8xf32, #tpu.memory_space<vmem>>, vector<16x8xf32>
    %cst_35 = arith.constant dense<0.000000e+00> : vector<16x256xf32>
    %153 = tpu.matmul %152, %151, %cst_35 {dimension_numbers = #tpu.dot_dimension_numbers<[1], [0], [0], [1], [0, 0, 1, 1], [], []>} : vector<16x8xf32>, vector<8x256xf32>, vector<16x256xf32> -> vector<16x256xf32>
    %c0_36 = arith.constant 0 : index
    %c0_37 = arith.constant 0 : index
    %154 = vector.load %arg5[%c0_36, %c0_37] : memref<16x1xf32, #tpu.memory_space<vmem>>, vector<16x1xf32>
    %155 = vector.broadcast %154 : vector<16x1xf32> to vector<16x256xf32>
    %156 = arith.addf %153, %155 : vector<16x256xf32>
    %157 = arith.addf %156, %1 : vector<16x256xf32>
    %cst_38 = arith.constant 0.000000e+00 : f32
    %158 = vector.broadcast %cst_38 : f32 to vector<16x256xf32>
    %159 = arith.maximumf %157, %158 : vector<16x256xf32>
    %c0_39 = arith.constant 0 : index
    %c0_40 = arith.constant 0 : index
    %c0_41 = arith.constant 0 : index
    %160 = vector.load %arg6[%c0_39, %c0_40, %c0_41] : memref<1x16x256xf32, #tpu.memory_space<vmem>>, vector<1x16x256xf32>
    %161 = vector.shape_cast %160 : vector<1x16x256xf32> to vector<16x256xf32>
    %162 = vector.shape_cast %159 : vector<16x256xf32> to vector<1x16x256xf32>
    tpu.vector_store %arg6[%c0_39, %c0_40, %c0_41], %162 {strides = array<i32>} : memref<1x16x256xf32, #tpu.memory_space<vmem>>, vector<1x16x256xf32>,
    return
  }
  func.func @transform_0(%arg0: i32) -> (i32, i32, i32) {
    %c0_i32 = arith.constant 0 : i32
    %c0_i32_0 = arith.constant 0 : i32
    %c0_i32_1 = arith.constant 0 : i32
    return %arg0, %c0_i32, %c0_i32_0 : i32, i32, i32
  }
  func.func @transform_1(%arg0: i32) -> (i32, i32) {
    %c0_i32 = arith.constant 0 : i32
    %c0_i32_0 = arith.constant 0 : i32
    %c0_i32_1 = arith.constant 0 : i32
    return %c0_i32, %c0_i32_0 : i32, i32
  }
  func.func @transform_2(%arg0: i32) -> (i32, i32) {
    %c0_i32 = arith.constant 0 : i32
    %c0_i32_0 = arith.constant 0 : i32
    %c0_i32_1 = arith.constant 0 : i32
    return %c0_i32, %c0_i32_0 : i32, i32
  }
  func.func @transform_3(%arg0: i32) -> (i32, i32) {
    %c0_i32 = arith.constant 0 : i32
    %c0_i32_0 = arith.constant 0 : i32
    %c0_i32_1 = arith.constant 0 : i32
    return %c0_i32, %c0_i32_0 : i32, i32
  }
  func.func @transform_4(%arg0: i32) -> (i32, i32) {
    %c0_i32 = arith.constant 0 : i32
    %c0_i32_0 = arith.constant 0 : i32
    %c0_i32_1 = arith.constant 0 : i32
    return %c0_i32, %c0_i32_0 : i32, i32
  }
  func.func @transform_5(%arg0: i32) -> (i32, i32, i32) {
    %c0_i32 = arith.constant 0 : i32
    %c0_i32_0 = arith.constant 0 : i32
    %c0_i32_1 = arith.constant 0 : i32
    return %arg0, %c0_i32, %c0_i32_0 : i32, i32, i32
  }
}

</mosaic_0001>

<llo_original>
// kernel: tpu_custom_call.1
$region0: #{tpu_custom_call.1}
  #allocation0 [shape = 'u32[]', space=smem, size = 0x4, offset = 0x4, fixed_abs, tag = 'smem constant byte address 0x4 - core index']
  #allocation1 [shape = 'u32[144,128]{1,0:T(1,128)}', space=vmem, size = 0x12000, scoped, tag = 'internal scratch']
  %s0 = inlined_call_operand.hbm [shape: f32[2,16,256], index: 0, kind: input, shape index: {}]
  %s1 = inlined_call_operand.vmem [shape: f32[8,16], index: 1, kind: input, shape index: {}]
  %s2 = inlined_call_operand.vmem [shape: f32[8,1], index: 2, kind: input, shape index: {}]
  %s3 = inlined_call_operand.vmem [shape: f32[16,8], index: 3, kind: input, shape index: {}]
  %s4 = inlined_call_operand.vmem [shape: f32[16,1], index: 4, kind: input, shape index: {}]
  %s5 = inlined_call_operand.hbm [shape: f32[2,16,256], index: 5, kind: output, shape index: {}]
  %s6 = sld [smem:[#allocation0]]
  $region57: #{tpu_custom_call.1} parent=0
    _
  %s8 = ssub.s32 1, %s6
  %s9 = scalar_select 0, %s8, %s6
  $region1: #{tpu_custom_call.1} parent=0
    #allocation2 [shape = 'u8[32768]{0}', space=vmem, size = 0x8000, scoped, tag = 'input window, operand 0']
    #allocation3 [shape = 's32[2]{0}', space=sflag, size = 0x8, scoped, tag = 'scoped memory for tpu_custom_call.1']
    #allocation4 [shape = 's32[2]{0}', space=sflag, size = 0x8, scoped, tag = 'scoped memory for tpu_custom_call.1']
    #allocation5 [shape = 'u8[32768]{0}', space=vmem, size = 0x8000, scoped, tag = 'output window, operand 0']
    %10 = vsyncpa [#allocation3], 0
    %s11 = scalar_lea.sflag [#allocation3], 1
    %12 = vsyncpa %s11, 0
    %13 = vsyncpa [#allocation4], 0
    %s14 = scalar_lea.sflag [#allocation4], 1
    %15 = vsyncpa %s14, 0
    loop: start=0, step=1, limit=4
    $region2: #{tpu_custom_call.1} parent=1 // loop_pre_header
      _
    $region3: #{tpu_custom_call.1} parent=1 // loop_header
      %s17 = sphi 0, %s21
      %p18 = scmp.ge.s32.totalorder %s17, 4
      %s27 = sphi 0, %s29
      %s30 = sphi 0, %s27
      %s31 = sphi 0, %s30
      %s47 = sphi 0, %s31
      %s51 = sphi 0, %s51
      %s53 = sphi 0, %s51
      %s54 = sphi 0, %s53
      %s68 = sphi 0, %s54
      %s72 = sphi 0, %s72
      %s74 = sphi 0, %s72
      %s75 = sphi 0, %s74
      %s89 = sphi 0, %s75
      %s93 = sphi 0, %s93
      %s95 = sphi 0, %s93
      %s96 = sphi 0, %s95
      %s110 = sphi 0, %s96
      %s114 = sphi 0, %s114
      %s116 = sphi 0, %s114
      %s117 = sphi 0, %s116
      %s131 = sphi 0, %s117
      %s137 = sphi 0, %s139
      %s140 = sphi 0, %s137
      %s141 = sphi 0, %s140
      %s157 = sphi 0, %s141
    $region4: #{tpu_custom_call.1} parent=1 // loop_header_branch
      %20 = sbr.rel (%p18) target = $region8
    $region5: #{tpu_custom_call.1} parent=1 // loop_body
      %s22 = ssub.s32 %s17, 1
      %s23 = ssub.s32 %s17, 2
      %s24 = sadd.s32 %s17, 1
      %s25 = ssub.s32 %s17, %s24
      %p26 = scmp.eq.s32.totalorder %s25, 0
      %s28 = sadd.s32 %s27, 1
      %s29 = scalar_select %p26, %s27, %s28
      %p32 = pneg %p26
      %p33 = scmp.eq.s32.totalorder %s17, 1
      %p34 = por %p32, %p33
      %p35 = scmp.ne.s32.totalorder %s27, %s30
      %p36 = scmp.eq.s32.totalorder %s17, 0
      %p37 = por %p35, %p36
      %p38 = scmp.ne.s32.totalorder %s27, %s30
      %p39 = scmp.eq.s32.totalorder %s22, 1
      %p40 = por %p38, %p39
      %p41 = scmp.ne.s32.totalorder %s30, %s31
      %p42 = scmp.eq.s32.totalorder %s22, 0
      %p43 = por %p41, %p42
      %p44 = scmp.ne.s32.totalorder %s30, %s31
      %p45 = scmp.eq.s32.totalorder %s23, 1
      %p46 = por %p44, %p45
      %p48 = scmp.ne.s32.totalorder %s31, %s47
      %p49 = scmp.eq.s32.totalorder %s23, 0
      %p50 = por %p48, %p49
      %s52 = sadd.s32 %s51, 1
      %p55 = scmp.eq.s32.totalorder %s17, 1
      %p56 = scmp.ne.s32.totalorder %s51, %s53
      %p57 = scmp.eq.s32.totalorder %s17, 0
      %p58 = por %p56, %p57
      %p59 = scmp.ne.s32.totalorder %s51, %s53
      %p60 = scmp.eq.s32.totalorder %s22, 1
      %p61 = por %p59, %p60
      %p62 = scmp.ne.s32.totalorder %s53, %s54
      %p63 = scmp.eq.s32.totalorder %s22, 0
      %p64 = por %p62, %p63
      %p65 = scmp.ne.s32.totalorder %s53, %s54
      %p66 = scmp.eq.s32.totalorder %s23, 1
      %p67 = por %p65, %p66
      %p69 = scmp.ne.s32.totalorder %s54, %s68
      %p70 = scmp.eq.s32.totalorder %s23, 0
      %p71 = por %p69, %p70
      %s73 = sadd.s32 %s72, 1
      %p76 = scmp.eq.s32.totalorder %s17, 1
      %p77 = scmp.ne.s32.totalorder %s72, %s74
      %p78 = scmp.eq.s32.totalorder %s17, 0
      %p79 = por %p77, %p78
      %p80 = scmp.ne.s32.totalorder %s72, %s74
      %p81 = scmp.eq.s32.totalorder %s22, 1
      %p82 = por %p80, %p81
      %p83 = scmp.ne.s32.totalorder %s74, %s75
      %p84 = scmp.eq.s32.totalorder %s22, 0
      %p85 = por %p83, %p84
      %p86 = scmp.ne.s32.totalorder %s74, %s75
      %p87 = scmp.eq.s32.totalorder %s23, 1
      %p88 = por %p86, %p87
      %p90 = scmp.ne.s32.totalorder %s75, %s89
      %p91 = scmp.eq.s32.totalorder %s23, 0
      %p92 = por %p90, %p91
      %s94 = sadd.s32 %s93, 1
      %p97 = scmp.eq.s32.totalorder %s17, 1
      %p98 = scmp.ne.s32.totalorder %s93, %s95
      %p99 = scmp.eq.s32.totalorder %s17, 0
      %p100 = por %p98, %p99
      %p101 = scmp.ne.s32.totalorder %s93, %s95
      %p102 = scmp.eq.s32.totalorder %s22, 1
      %p103 = por %p101, %p102
      %p104 = scmp.ne.s32.totalorder %s95, %s96
      %p105 = scmp.eq.s32.totalorder %s22, 0
      %p106 = por %p104, %p105
      %p107 = scmp.ne.s32.totalorder %s95, %s96
      %p108 = scmp.eq.s32.totalorder %s23, 1
      %p109 = por %p107, %p108
      %p111 = scmp.ne.s32.totalorder %s96, %s110
      %p112 = scmp.eq.s32.totalorder %s23, 0
      %p113 = por %p111, %p112
      %s115 = sadd.s32 %s114, 1
      %p118 = scmp.eq.s32.totalorder %s17, 1
      %p119 = scmp.ne.s32.totalorder %s114, %s116
      %p120 = scmp.eq.s32.totalorder %s17, 0
      %p121 = por %p119, %p120
      %p122 = scmp.ne.s32.totalorder %s114, %s116
      %p123 = scmp.eq.s32.totalorder %s22, 1
      %p124 = por %p122, %p123
      %p125 = scmp.ne.s32.totalorder %s116, %s117
      %p126 = scmp.eq.s32.totalorder %s22, 0
      %p127 = por %p125, %p126
      %p128 = scmp.ne.s32.totalorder %s116, %s117
      %p129 = scmp.eq.s32.totalorder %s23, 1
      %p130 = por %p128, %p129
      %p132 = scmp.ne.s32.totalorder %s117, %s131
      %p133 = scmp.eq.s32.totalorder %s23, 0
      %p134 = por %p132, %p133
      %s135 = ssub.s32 %s17, %s24
      %p136 = scmp.eq.s32.totalorder %s135, 0
      %s138 = sadd.s32 %s137, 1
      %s139 = scalar_select %p136, %s137, %s138
      %p142 = pneg %p136
      %p143 = scmp.eq.s32.totalorder %s17, 1
      %p144 = por %p142, %p143
      %p145 = scmp.ne.s32.totalorder %s137, %s140
      %p146 = scmp.eq.s32.totalorder %s17, 0
      %p147 = por %p145, %p146
      %p148 = scmp.ne.s32.totalorder %s137, %s140
      %p149 = scmp.eq.s32.totalorder %s22, 1
      %p150 = por %p148, %p149
      %p151 = scmp.ne.s32.totalorder %s140, %s141
      %p152 = scmp.eq.s32.totalorder %s22, 0
      %p153 = por %p151, %p152
      %p154 = scmp.ne.s32.totalorder %s140, %s141
      %p155 = scmp.eq.s32.totalorder %s23, 1
      %p156 = por %p154, %p155
      %p158 = scmp.ne.s32.totalorder %s141, %s157
      %p159 = scmp.eq.s32.totalorder %s23, 0
      %p160 = por %p158, %p159
      %p161 = scmp.le.s32.totalorder 1, %s17
      %p162 = scmp.lt.s32.totalorder %s17, 3
      %p163 = pnand %p161, %p162
      %p164 = pneg %p163
      // Predicated region
      $region9: #{tpu_custom_call.1} parent=5 // pred_check
        _
      $region10: #{tpu_custom_call.1} parent=5 // pred_check_branch
        %166 = sbr.rel (%p163) target = $region12
      $region11: #{tpu_custom_call.1} parent=5 // pred_region
        %s167 = ssub.s32 %s17, 1
        // Predicated region
        $region13: #{tpu_custom_call.1} parent=11 // pred_check
          %p168 = pneg %p64
        $region14: #{tpu_custom_call.1} parent=11 // pred_check_branch
          %170 = sbr.rel (%p168) target = $region16
        $region15: #{tpu_custom_call.1} parent=11 // pred_region
          _
        $region16: #{tpu_custom_call.1} parent=11 // pred_fallthru
          _
        // Predicated region
        $region17: #{tpu_custom_call.1} parent=11 // pred_check
          %p171 = pneg %p85
        $region18: #{tpu_custom_call.1} parent=11 // pred_check_branch
          %173 = sbr.rel (%p171) target = $region20
        $region19: #{tpu_custom_call.1} parent=11 // pred_region
          _
        $region20: #{tpu_custom_call.1} parent=11 // pred_fallthru
          _
        // Predicated region
        $region21: #{tpu_custom_call.1} parent=11 // pred_check
          %p174 = pneg %p106
        $region22: #{tpu_custom_call.1} parent=11 // pred_check_branch
          %176 = sbr.rel (%p174) target = $region24
        $region23: #{tpu_custom_call.1} parent=11 // pred_region
          _
        $region24: #{tpu_custom_call.1} parent=11 // pred_fallthru
          _
        // Predicated region
        $region25: #{tpu_custom_call.1} parent=11 // pred_check
          %p177 = pneg %p127
        $region26: #{tpu_custom_call.1} parent=11 // pred_check_branch
          %179 = sbr.rel (%p177) target = $region28
        $region27: #{tpu_custom_call.1} parent=11 // pred_region
          _
        $region28: #{tpu_custom_call.1} parent=11 // pred_fallthru
          _
      $region12: #{tpu_custom_call.1} parent=5 // pred_fallthru
        _
      %p180 = scmp.lt.s32.totalorder %s17, 2
      // Predicated region
      $region29: #{tpu_custom_call.1} parent=5 // pred_check
        %p181 = pneg %p180
      $region30: #{tpu_custom_call.1} parent=5 // pred_check_branch
        %183 = sbr.rel (%p181) target = $region32
      $region31: #{tpu_custom_call.1} parent=5 // pred_region
        // Predicated region
        $region33: #{tpu_custom_call.1} parent=31 // pred_check
          %p184 = pneg %p37
        $region34: #{tpu_custom_call.1} parent=31 // pred_check_branch
          %186 = sbr.rel (%p184) target = $region36
        $region35: #{tpu_custom_call.1} parent=31 // pred_region
          %s187 = sand.u32 %s27, 1
          %s188 = scalar_lea.sflag [#allocation3], %s187
          %s189 = sand.u32 %s27, 1
          %s190 = smul.addr %s189, 32
          %s191 = scalar_lea.vmem [#allocation2], %s190
          %s193 = ssub.s32 512, 512
          %194 = vsyncadd %s188, %s193
          %s195 = smul.addr %s17, 4
          %s196 = smul.addr %s195, 128
          %s197 = scalar_lea.hbm %s0, %s196
          %s198 = sshll.u32 %s191, 4
          %s199 = int_to_ptr.vmem [resolvable:$true] %s198
          %204 = dma.hbm_to_vmem [thread:$0]  %s197, 512, %s199, %s188, 256, 256, 16
        $region36: #{tpu_custom_call.1} parent=31 // pred_fallthru
          _
      $region32: #{tpu_custom_call.1} parent=5 // pred_fallthru
        _
      %p205 = scmp.le.s32.totalorder 1, %s17
      %p206 = scmp.lt.s32.totalorder %s17, 3
      %p207 = pnand %p205, %p206
      %p208 = pneg %p207
      // Predicated region
      $region37: #{tpu_custom_call.1} parent=5 // pred_check
        _
      $region38: #{tpu_custom_call.1} parent=5 // pred_check_branch
        %210 = sbr.rel (%p207) target = $region40
      $region39: #{tpu_custom_call.1} parent=5 // pred_region
        %s211 = ssub.s32 %s17, 1
        %s212 = sand.u32 %s30, 1
        %s213 = scalar_lea.sflag [#allocation3], %s212
        %s214 = sand.u32 %s30, 1
        %s215 = smul.addr %s214, 32
        %s216 = scalar_lea.vmem [#allocation2], %s215
        // Predicated region
        $region41: #{tpu_custom_call.1} parent=39 // pred_check
          %p217 = pneg %p43
        $region42: #{tpu_custom_call.1} parent=39 // pred_check_branch
          %219 = sbr.rel (%p217) target = $region44
        $region43: #{tpu_custom_call.1} parent=39 // pred_region
          %220 = dma.done %s213, 512
        $region44: #{tpu_custom_call.1} parent=39 // pred_fallthru
          _
        %s221 = sand.u32 %s30, 1
        %s222 = scalar_lea.sflag [#allocation3], %s221
        %s223 = sand.u32 %s30, 1
        %s224 = smul.addr %s223, 32
        %s225 = scalar_lea.vmem [#allocation2], %s224
        %p226 = pneg %p43
        %p227 = pneg %p40
        %p228 = pneg %p64
        %p229 = pneg %p61
        %p230 = pneg %p85
        %p231 = pneg %p82
        %p232 = pneg %p106
        %p233 = pneg %p103
        %p234 = pneg %p127
        %p235 = pneg %p124
        %p236 = pneg %p153
        %p237 = pneg %p150
        %s238 = sand.u32 %s140, 1
        %s239 = scalar_lea.sflag [#allocation4], %s238
        %s240 = sand.u32 %s140, 1
        %s241 = smul.addr %s240, 32
        %s242 = scalar_lea.vmem [#allocation5], %s241
        %v243 = vld [vmem:[%s216] sm:$0xff]
        %v244 = vld [vmem:[%s216 + $0x8] sm:$0xff]
        %v245 = vld [vmem:[%s216 + $0x10] sm:$0xff]
        %v246 = vld [vmem:[%s216 + $0x18] sm:$0xff]
        %v247 = vld [vmem:[%s1] sm:$0xff]
        %v248 = vld [vmem:[%s2] sm:$0xff]
        %250 = vset.pattern.permute.xlu0 0
        %251 = vperm.xlu0 %250, %v248
        %v252 = vpop.permute.xlu0 %251
        %vm254 = vcmask 130048
        %v256 = vsel %vm254, %v247, 0
        %258 = vmatprep.subr.mxu0 0.0
        %259 = vmatpush1.msra.mxu0 0.0
        %260 = vmatprep.subr.mxu0 0.0
        %261 = vmatpush1.msra.mxu0 0.0
        %262 = vmatprep.subr.mxu0 0.0
        %263 = vmatpush1.msra.mxu0 0.0
        %264 = vmatprep.subr.mxu0 0.0
        %265 = vmatpush1.msra.mxu0 0.0
        %266 = vmatprep.subr.mxu0 0.0
        %267 = vmatpush1.msra.mxu0 0.0
        %268 = vmatprep.subr.mxu0 0.0
        %269 = vmatpush1.msra.mxu0 0.0
        %270 = vmatprep.subr.mxu0 0.0
        %271 = vmatpush1.msra.mxu0 0.0
        %272 = vmatprep.subr.mxu0 0.0
        %273 = vmatpush1.msra.mxu0 0.0
        %274 = vmatprep.subr.mxu0 0.0
        %275 = vmatpush1.msra.mxu0 0.0
        %276 = vmatprep.subr.mxu0 0.0
        %277 = vmatpush1.msra.mxu0 0.0
        %278 = vmatprep.subr.mxu0 0.0
        %279 = vmatpush1.msra.mxu0 0.0
        %280 = vmatprep.subr.mxu0 0.0
        %281 = vmatpush1.msra.mxu0 0.0
        %282 = vmatprep.subr.mxu0 0.0
        %283 = vmatpush1.msra.mxu0 0.0
        %284 = vmatprep.subr.mxu0 0.0
        %285 = vmatpush1.msra.mxu0 0.0
        %286 = vmatprep.subr.mxu0 %v246
        %287 = vmatpush1.msra.mxu0 %v245
        %288 = vmatprep.subr.mxu0 %v244
        %289 = vmatpush1.msra.mxu0 %v243
        %290 = vmatprep.subr.mxu0 0.0
        %291 = vmatpush2.msra.mxu0 0.0
        %292 = vmatprep.subr.mxu0 0.0
        %293 = vmatpush2.msra.mxu0 0.0
        %294 = vmatprep.subr.mxu0 0.0
        %295 = vmatpush2.msra.mxu0 0.0
        %296 = vmatprep.subr.mxu0 0.0
        %297 = vmatpush2.msra.mxu0 0.0
        %298 = vmatprep.subr.mxu0 0.0
        %299 = vmatpush2.msra.mxu0 0.0
        %300 = vmatprep.subr.mxu0 0.0
        %301 = vmatpush2.msra.mxu0 0.0
        %302 = vmatprep.subr.mxu0 0.0
        %303 = vmatpush2.msra.mxu0 0.0
        %304 = vmatprep.subr.mxu0 0.0
        %305 = vmatpush2.msra.mxu0 0.0
        %306 = vmatprep.subr.mxu0 0.0
        %307 = vmatpush2.msra.mxu0 0.0
        %308 = vmatprep.subr.mxu0 0.0
        %309 = vmatpush2.msra.mxu0 0.0
        %310 = vmatprep.subr.mxu0 0.0
        %311 = vmatpush2.msra.mxu0 0.0
        %312 = vmatprep.subr.mxu0 0.0
        %313 = vmatpush2.msra.mxu0 0.0
        %314 = vmatprep.subr.mxu0 0.0
        %315 = vmatpush2.msra.mxu0 0.0
        %316 = vmatprep.subr.mxu0 0.0
        %317 = vmatpush2.msra.mxu0 0.0
        %318 = vmatprep.subr.mxu0 0.0
        %319 = vmatpush2.msra.mxu0 0.0
        %320 = vmatprep.subr.mxu0 0.0
        %321 = vmatpush2.msra.mxu0 0.0
        %322 = vmatprep.mubr.f32.mxu0 0.0
        %323 = vmatmul.mubr.f32.gmra.mxu0 %v256
        %v324 = vpop.f32.mrf.mxu0
        %v325 = vadd.f32 %v252, %v324
        %v326 = vpop.f32.mrf.mxu0
        %v327 = vadd.f32 %v252, %v326
        %328 = vdwg.mxu0
        %v329 = vadd.f32 %v325, %v327
        %330 = vadd.xlane.f32.xlu0 %v329
        %v331 = vpop.xlane.xlu0 %330
        %v332 = vmul.f32 %v331, 0.00390625
        %v333 = vsub.f32 %v325, %v332
        %v334 = vsub.f32 %v327, %v332
        %v335 = vmul.f32 %v333, %v333
        %v336 = vmul.f32 %v334, %v334
        %v337 = vmul.f32 %v335, %v333
        %v338 = vmul.f32 %v336, %v334
        %v339 = vadd.f32 %v335, %v336
        %340 = vadd.xlane.f32.xlu0 %v339
        %v341 = vpop.xlane.xlu0 %340
        %v342 = vmul.f32 %v341, 0.00390625
        %v343 = vrsqrt.pop %v342
        %v344 = vmul.f32 %v342, %v343
        %vm345 = vcmp.eq.f32.partialorder %v342, inf
        %v346 = vsel %vm345, %v342, %v344
        %vm347 = vcmp.eq.f32.partialorder %v342, 0.0
        %v348 = vand.u32 %v342, 2147483648
        %v349 = vsel %vm347, %v348, %v346
        %v350 = vmax.f32 %v342, 1e-12
        %v351 = vrsqrt.pop %v350
        %v352 = vmul.f32 %v351, %v351
        %v353 = vmul.f32 %v352, %v352
        %v354 = vmul.f32 %v335, %v335
        %v355 = vmul.f32 %v336, %v336
        %v356 = vadd.f32 %v354, %v355
        %357 = vadd.xlane.f32.xlu0 %v356
        %v358 = vpop.xlane.xlu0 %357
        %v359 = vmul.f32 %v358, 0.00390625
        %v360 = vmul.f32 %v359, %v353
        %v361 = vmul.f32 %v335, %v337
        %v362 = vmul.f32 %v336, %v338
        %v363 = vadd.f32 %v361, %v362
        %364 = vadd.xlane.f32.xlu0 %v363
        %v365 = vpop.xlane.xlu0 %364
        %v366 = vmul.f32 %v365, 0.00390625
        %v367 = vmul.f32 %v353, %v351
        %v368 = vmul.f32 %v366, %v367
        %v369 = vmul.f32 %v337, %v337
        %v370 = vmul.f32 %v338, %v338
        %v371 = vadd.f32 %v369, %v370
        %372 = vadd.xlane.f32.xlu0 %v371
        %v373 = vpop.xlane.xlu0 %372
        %v374 = vmul.f32 %v373, 0.00390625
        %v375 = vmul.f32 %v353, %v352
        %v376 = vmul.f32 %v374, %v375
        %v377 = vmul.f32 %v332, %v332
        %v378 = vrot.slane %v377, 4
        %v379 = vadd.f32 %v377, %v378
        %v380 = vrot.slane %v379, 2
        %v381 = vadd.f32 %v379, %v380
        %v382 = vrot.slane %v381, 1
        %v383 = vadd.f32 %v381, %v382
        %v384 = vrsqrt.pop %v383
        %v385 = vmul.f32 %v383, %v384
        %vm386 = vcmp.eq.f32.partialorder %v383, inf
        %v387 = vsel %vm386, %v383, %v385
        %vm388 = vcmp.eq.f32.partialorder %v383, 0.0
        %v389 = vand.u32 %v383, 2147483648
        %v390 = vsel %vm388, %v389, %v387
        %v391 = vmax.f32 %v390, 1e-12
        %v392 = vrcp.pop %v391
        %v393 = vmul.f32 %v332, %v392
        %v394 = vmul.f32 %v349, %v349
        %v395 = vrot.slane %v394, 4
        %v396 = vadd.f32 %v394, %v395
        %v397 = vrot.slane %v396, 2
        %v398 = vadd.f32 %v396, %v397
        %v399 = vrot.slane %v398, 1
        %v400 = vadd.f32 %v398, %v399
        %v401 = vrsqrt.pop %v400
        %v402 = vmul.f32 %v400, %v401
        %vm403 = vcmp.eq.f32.partialorder %v400, inf
        %v404 = vsel %vm403, %v400, %v402
        %vm405 = vcmp.eq.f32.partialorder %v400, 0.0
        %v406 = vand.u32 %v400, 2147483648
        %v407 = vsel %vm405, %v406, %v404
        %v408 = vmax.f32 %v407, 1e-12
        %v409 = vrcp.pop %v408
        %v410 = vmul.f32 %v349, %v409
        %v411 = vmul.f32 %v360, %v360
        %v412 = vrot.slane %v411, 4
        %v413 = vadd.f32 %v411, %v412
        %v414 = vrot.slane %v413, 2
        %v415 = vadd.f32 %v413, %v414
        %v416 = vrot.slane %v415, 1
        %v417 = vadd.f32 %v415, %v416
        %v418 = vrsqrt.pop %v417
        %v419 = vmul.f32 %v417, %v418
        %vm420 = vcmp.eq.f32.partialorder %v417, inf
        %v421 = vsel %vm420, %v417, %v419
        %vm422 = vcmp.eq.f32.partialorder %v417, 0.0
        %v423 = vand.u32 %v417, 2147483648
        %v424 = vsel %vm422, %v423, %v421
        %v425 = vmax.f32 %v424, 1e-12
        %v426 = vrcp.pop %v425
        %v427 = vmul.f32 %v360, %v426
        %v428 = vmul.f32 %v368, %v368
        %v429 = vrot.slane %v428, 4
        %v430 = vadd.f32 %v428, %v429
        %v431 = vrot.slane %v430, 2
        %v432 = vadd.f32 %v430, %v431
        %v433 = vrot.slane %v432, 1
        %v434 = vadd.f32 %v432, %v433
        %v435 = vrsqrt.pop %v434
        %v436 = vmul.f32 %v434, %v435
        %vm437 = vcmp.eq.f32.partialorder %v434, inf
        %v438 = vsel %vm437, %v434, %v436
        %vm439 = vcmp.eq.f32.partialorder %v434, 0.0
        %v440 = vand.u32 %v434, 2147483648
        %v441 = vsel %vm439, %v440, %v438
        %v442 = vmax.f32 %v441, 1e-12
        %v443 = vrcp.pop %v442
        %v444 = vmul.f32 %v368, %v443
        %v445 = vmul.f32 %v376, %v376
        %v446 = vrot.slane %v445, 4
        %v447 = vadd.f32 %v445, %v446
        %v448 = vrot.slane %v447, 2
        %v449 = vadd.f32 %v447, %v448
        %v450 = vrot.slane %v449, 1
        %v451 = vadd.f32 %v449, %v450
        %v452 = vrsqrt.pop %v451
        %v453 = vmul.f32 %v451, %v452
        %vm454 = vcmp.eq.f32.partialorder %v451, inf
        %v455 = vsel %vm454, %v451, %v453
        %vm456 = vcmp.eq.f32.partialorder %v451, 0.0
        %v457 = vand.u32 %v451, 2147483648
        %v458 = vsel %vm456, %v457, %v455
        %v459 = vmax.f32 %v458, 1e-12
        %v460 = vrcp.pop %v459
        %v461 = vmul.f32 %v376, %v460
        %v462 = vmul.f32 %v325, %v393
        %v463 = vmul.f32 %v327, %v393
        %v464 = vrot.slane %v462, 4
        %v465 = vadd.f32 %v462, %v464
        %v466 = vrot.slane %v465, 2
        %v467 = vadd.f32 %v465, %v466
        %v468 = vrot.slane %v467, 1
        %v469 = vadd.f32 %v467, %v468
        %v470 = vrot.slane %v463, 4
        %v471 = vadd.f32 %v463, %v470
        %v472 = vrot.slane %v471, 2
        %v473 = vadd.f32 %v471, %v472
        %v474 = vrot.slane %v473, 1
        %v475 = vadd.f32 %v473, %v474
        %v476 = vmul.f32 %v325, %v410
        %v477 = vmul.f32 %v327, %v410
        %v478 = vrot.slane %v476, 4
        %v479 = vadd.f32 %v476, %v478
        %v480 = vrot.slane %v479, 2
        %v481 = vadd.f32 %v479, %v480
        %v482 = vrot.slane %v481, 1
        %v483 = vadd.f32 %v481, %v482
        %v484 = vrot.slane %v477, 4
        %v485 = vadd.f32 %v477, %v484
        %v486 = vrot.slane %v485, 2
        %v487 = vadd.f32 %v485, %v486
        %v488 = vrot.slane %v487, 1
        %v489 = vadd.f32 %v487, %v488
        %v490 = vmul.f32 %v325, %v427
        %v491 = vmul.f32 %v327, %v427
        %v492 = vrot.slane %v490, 4
        %v493 = vadd.f32 %v490, %v492
        %v494 = vrot.slane %v493, 2
        %v495 = vadd.f32 %v493, %v494
        %v496 = vrot.slane %v495, 1
        %v497 = vadd.f32 %v495, %v496
        %v498 = vrot.slane %v491, 4
        %v499 = vadd.f32 %v491, %v498
        %v500 = vrot.slane %v499, 2
        %v501 = vadd.f32 %v499, %v500
        %v502 = vrot.slane %v501, 1
        %v503 = vadd.f32 %v501, %v502
        %v504 = vmul.f32 %v325, %v444
        %v505 = vmul.f32 %v327, %v444
        %v506 = vrot.slane %v504, 4
        %v507 = vadd.f32 %v504, %v506
        %v508 = vrot.slane %v507, 2
        %v509 = vadd.f32 %v507, %v508
        %v510 = vrot.slane %v509, 1
        %v511 = vadd.f32 %v509, %v510
        %v512 = vrot.slane %v505, 4
        %v513 = vadd.f32 %v505, %v512
        %v514 = vrot.slane %v513, 2
        %v515 = vadd.f32 %v513, %v514
        %v516 = vrot.slane %v515, 1
        %v517 = vadd.f32 %v515, %v516
        %v518 = vmul.f32 %v325, %v461
        %v519 = vmul.f32 %v327, %v461
        %v520 = vrot.slane %v518, 4
        %v521 = vadd.f32 %v518, %v520
        %v522 = vrot.slane %v521, 2
        %v523 = vadd.f32 %v521, %v522
        %v524 = vrot.slane %v523, 1
        %v525 = vadd.f32 %v523, %v524
        %v526 = vrot.slane %v519, 4
        %v527 = vadd.f32 %v519, %v526
        %v528 = vrot.slane %v527, 2
        %v529 = vadd.f32 %v527, %v528
        %v530 = vrot.slane %v529, 1
        %v531 = vadd.f32 %v529, %v530
        %v532 = vmax.f32 %v469, %v483
        %v533 = vmax.f32 %v475, %v489
        %v534 = vmax.f32 %v532, %v497
        %v535 = vmax.f32 %v533, %v503
        %v536 = vmax.f32 %v534, %v511
        %v537 = vmax.f32 %v535, %v517
        %v538 = vmax.f32 %v536, %v525
        %v539 = vmax.f32 %v537, %v531
        %v540 = vsub.f32 %v469, %v538
        %v541 = vsub.f32 %v475, %v539
        %v542 = vmul.f32 %v540, 1.442695
        %v543 = vpow.pop %v542
        %v544 = vmul.f32 %v541, 1.442695
        %v545 = vpow.pop %v544
        %v546 = vsub.f32 %v483, %v538
        %v547 = vsub.f32 %v489, %v539
        %v548 = vmul.f32 %v546, 1.442695
        %v549 = vpow.pop %v548
        %v550 = vmul.f32 %v547, 1.442695
        %v551 = vpow.pop %v550
        %v552 = vsub.f32 %v497, %v538
        %v553 = vsub.f32 %v503, %v539
        %v554 = vmul.f32 %v552, 1.442695
        %v555 = vpow.pop %v554
        %v556 = vmul.f32 %v553, 1.442695
        %v557 = vpow.pop %v556
        %v558 = vsub.f32 %v511, %v538
        %v559 = vsub.f32 %v517, %v539
        %v560 = vmul.f32 %v558, 1.442695
        %v561 = vpow.pop %v560
        %v562 = vmul.f32 %v559, 1.442695
        %v563 = vpow.pop %v562
        %v564 = vsub.f32 %v525, %v538
        %v565 = vsub.f32 %v531, %v539
        %v566 = vmul.f32 %v564, 1.442695
        %v567 = vpow.pop %v566
        %v568 = vmul.f32 %v565, 1.442695
        %v569 = vpow.pop %v568
        %v570 = vadd.f32 %v543, %v549
        %v571 = vadd.f32 %v545, %v551
        %v572 = vadd.f32 %v570, %v555
        %v573 = vadd.f32 %v571, %v557
        %v574 = vadd.f32 %v572, %v561
        %v575 = vadd.f32 %v573, %v563
        %v576 = vadd.f32 %v574, %v567
        %v577 = vadd.f32 %v575, %v569
        %v578 = vrcp.pop %v576
        %v579 = vrcp.pop %v577
        %v580 = vmul.f32 %v576, %v578
        %v581 = vmul.f32 %v577, %v579
        %v582 = vsub.f32 2.0, %v580
        %v583 = vsub.f32 2.0, %v581
        %v584 = vmul.f32 %v578, %v582
        %v585 = vmul.f32 %v579, %v583
        %v586 = vmul.f32 %v543, %v584
        %v587 = vmul.f32 %v545, %v585
        %v588 = vmul.f32 %v393, %v586
        %v589 = vmul.f32 %v393, %v587
        %v590 = vmul.f32 %v549, %v584
        %v591 = vmul.f32 %v551, %v585
        %v592 = vmul.f32 %v410, %v590
        %v593 = vmul.f32 %v410, %v591
        %v594 = vadd.f32 %v588, %v592
        %v595 = vadd.f32 %v589, %v593
        %v596 = vmul.f32 %v555, %v584
        %v597 = vmul.f32 %v557, %v585
        %v598 = vmul.f32 %v427, %v596
        %v599 = vmul.f32 %v427, %v597
        %v600 = vadd.f32 %v594, %v598
        %v601 = vadd.f32 %v595, %v599
        %v602 = vmul.f32 %v561, %v584
        %v603 = vmul.f32 %v563, %v585
        %v604 = vmul.f32 %v444, %v602
        %v605 = vmul.f32 %v444, %v603
        %v606 = vadd.f32 %v600, %v604
        %v607 = vadd.f32 %v601, %v605
        %v608 = vmul.f32 %v567, %v584
        %v609 = vmul.f32 %v569, %v585
        %v610 = vmul.f32 %v461, %v608
        %v611 = vmul.f32 %v461, %v609
        %v612 = vadd.f32 %v606, %v610
        %v613 = vadd.f32 %v607, %v611
        %v614 = vld [vmem:[%s3] sm:$0xff]
        %v615 = vld [vmem:[%s3 + $0x8] sm:$0xff]
        %v616 = vld [vmem:[%s4] sm:$0xff]
        %v617 = vld [vmem:[%s4 + $0x8] sm:$0xff]
        %619 = vset.pattern.permute.xlu0 0
        %620 = vperm.xlu0 %619, %v616
        %v621 = vpop.permute.xlu0 %620
        %624 = vset.pattern.permute.xlu0 0
        %625 = vperm.xlu0 %624, %v617
        %v626 = vpop.permute.xlu0 %625
        %vm628 = vcmask 64512
        %v630 = vsel %vm628, %v614, 0
        %v633 = vsel %vm628, %v615, 0
        %635 = vmatprep.subr.mxu0 0.0
        %636 = vmatpush1.msra.mxu0 0.0
        %637 = vmatprep.subr.mxu0 0.0
        %638 = vmatpush1.msra.mxu0 0.0
        %639 = vmatprep.subr.mxu0 0.0
        %640 = vmatpush1.msra.mxu0 0.0
        %641 = vmatprep.subr.mxu0 0.0
        %642 = vmatpush1.msra.mxu0 0.0
        %643 = vmatprep.subr.mxu0 0.0
        %644 = vmatpush1.msra.mxu0 0.0
        %645 = vmatprep.subr.mxu0 0.0
        %646 = vmatpush1.msra.mxu0 0.0
        %647 = vmatprep.subr.mxu0 0.0
        %648 = vmatpush1.msra.mxu0 0.0
        %649 = vmatprep.subr.mxu0 0.0
        %650 = vmatpush1.msra.mxu0 0.0
        %651 = vmatprep.subr.mxu0 0.0
        %652 = vmatpush1.msra.mxu0 0.0
        %653 = vmatprep.subr.mxu0 0.0
        %654 = vmatpush1.msra.mxu0 0.0
        %655 = vmatprep.subr.mxu0 0.0
        %656 = vmatpush1.msra.mxu0 0.0
        %657 = vmatprep.subr.mxu0 0.0
        %658 = vmatpush1.msra.mxu0 0.0
        %659 = vmatprep.subr.mxu0 0.0
        %660 = vmatpush1.msra.mxu0 0.0
        %661 = vmatprep.subr.mxu0 0.0
        %662 = vmatpush1.msra.mxu0 0.0
        %663 = vmatprep.subr.mxu0 0.0
        %664 = vmatpush1.msra.mxu0 0.0
        %665 = vmatprep.subr.mxu0 %v613
        %666 = vmatpush1.msra.mxu0 %v612
        %667 = vmatprep.subr.mxu0 0.0
        %668 = vmatpush2.msra.mxu0 0.0
        %669 = vmatprep.subr.mxu0 0.0
        %670 = vmatpush2.msra.mxu0 0.0
        %671 = vmatprep.subr.mxu0 0.0
        %672 = vmatpush2.msra.mxu0 0.0
        %673 = vmatprep.subr.mxu0 0.0
        %674 = vmatpush2.msra.mxu0 0.0
        %675 = vmatprep.subr.mxu0 0.0
        %676 = vmatpush2.msra.mxu0 0.0
        %677 = vmatprep.subr.mxu0 0.0
        %678 = vmatpush2.msra.mxu0 0.0
        %679 = vmatprep.subr.mxu0 0.0
        %680 = vmatpush2.msra.mxu0 0.0
        %681 = vmatprep.subr.mxu0 0.0
        %682 = vmatpush2.msra.mxu0 0.0
        %683 = vmatprep.subr.mxu0 0.0
        %684 = vmatpush2.msra.mxu0 0.0
        %685 = vmatprep.subr.mxu0 0.0
        %686 = vmatpush2.msra.mxu0 0.0
        %687 = vmatprep.subr.mxu0 0.0
        %688 = vmatpush2.msra.mxu0 0.0
        %689 = vmatprep.subr.mxu0 0.0
        %690 = vmatpush2.msra.mxu0 0.0
        %691 = vmatprep.subr.mxu0 0.0
        %692 = vmatpush2.msra.mxu0 0.0
        %693 = vmatprep.subr.mxu0 0.0
        %694 = vmatpush2.msra.mxu0 0.0
        %695 = vmatprep.subr.mxu0 0.0
        %696 = vmatpush2.msra.mxu0 0.0
        %697 = vmatprep.subr.mxu0 0.0
        %698 = vmatpush2.msra.mxu0 0.0
        %699 = vmatprep.mubr.f32.mxu0 0.0
        %700 = vmatmul.mubr.f32.gmra.mxu0 %v630
        %v701 = vpop.f32.mrf.mxu0
        %v702 = vadd.f32 %v621, %v701
        %v703 = vpop.f32.mrf.mxu0
        %v704 = vadd.f32 %v621, %v703
        %705 = vmatprep.mubr.f32.mxu0 0.0
        %706 = vmatmul.mubr.f32.gmra.mxu0 %v633
        %v707 = vpop.f32.mrf.mxu0
        %v708 = vadd.f32 %v626, %v707
        %v709 = vpop.f32.mrf.mxu0
        %v710 = vadd.f32 %v626, %v709
        %711 = vdwg.mxu0
        %v712 = vadd.f32 %v702, %v243
        %v713 = vadd.f32 %v704, %v244
        %v714 = vadd.f32 %v708, %v245
        %v715 = vadd.f32 %v710, %v246
        %v716 = vmax.f32 %v712, 0.0
        %v717 = vmax.f32 %v713, 0.0
        %v718 = vmax.f32 %v714, 0.0
        %v719 = vmax.f32 %v715, 0.0
        %720 = vst [vmem:[%s242] sm:$0xff] %v716
        %721 = vst [vmem:[%s242 + $0x8] sm:$0xff] %v717
        %722 = vst [vmem:[%s242 + $0x10] sm:$0xff] %v718
        %723 = vst [vmem:[%s242 + $0x18] sm:$0xff] %v719
        %s724 = sand.u32 %s140, 1
        %s725 = scalar_lea.sflag [#allocation4], %s724
        %s726 = sand.u32 %s140, 1
        %s727 = smul.addr %s726, 32
        %s728 = scalar_lea.vmem [#allocation5], %s727
        // Predicated region
        $region45: #{tpu_custom_call.1} parent=39 // pred_check
          %p729 = pneg %p150
        $region46: #{tpu_custom_call.1} parent=39 // pred_check_branch
          %731 = sbr.rel (%p729) target = $region48
        $region47: #{tpu_custom_call.1} parent=39 // pred_region
          %s733 = ssub.s32 512, 512
          %734 = vsyncadd %s725, %s733
          %s735 = smul.addr %s22, 4
          %s736 = smul.addr %s735, 128
          %s737 = scalar_lea.hbm %s5, %s736
          %s738 = sshll.u32 %s728, 4
          %s739 = int_to_ptr.vmem [resolvable:$true] %s738
          %744 = dma.vmem_to_hbm [thread:$0]  %s739, 512, %s737, %s725, 256, 256, 16
        $region48: #{tpu_custom_call.1} parent=39 // pred_fallthru
          _
      $region40: #{tpu_custom_call.1} parent=5 // pred_fallthru
        _
      %p745 = scmp.le.s32.totalorder 2, %s17
      // Predicated region
      $region49: #{tpu_custom_call.1} parent=5 // pred_check
        %p746 = pneg %p745
      $region50: #{tpu_custom_call.1} parent=5 // pred_check_branch
        %748 = sbr.rel (%p746) target = $region52
      $region51: #{tpu_custom_call.1} parent=5 // pred_region
        %s749 = ssub.s32 %s17, 2
        // Predicated region
        $region53: #{tpu_custom_call.1} parent=51 // pred_check
          %p750 = pneg %p156
        $region54: #{tpu_custom_call.1} parent=51 // pred_check_branch
          %752 = sbr.rel (%p750) target = $region56
        $region55: #{tpu_custom_call.1} parent=51 // pred_region
          %s753 = sand.u32 %s141, 1
          %s754 = scalar_lea.sflag [#allocation4], %s753
          %s755 = sand.u32 %s141, 1
          %s756 = smul.addr %s755, 32
          %s757 = scalar_lea.vmem [#allocation5], %s756
          %758 = dma.done %s754, 512
        $region56: #{tpu_custom_call.1} parent=51 // pred_fallthru
          _
      $region52: #{tpu_custom_call.1} parent=5 // pred_fallthru
        _
    $region6: #{tpu_custom_call.1} parent=1 // loop_footer
      %s21 = sadd.s32 1, %s17
    $region7: #{tpu_custom_call.1} parent=1 // loop_footer_branch
      %16 = sbr.rel target = $region3
    $region8: #{tpu_custom_call.1} parent=1 // loop_exit
      _
    %759 = vsyncpa [#allocation3], 1
    %s760 = scalar_lea.sflag [#allocation3], 1
    %761 = vsyncpa %s760, 1
    %762 = vsyncpa [#allocation4], 1
    %s763 = scalar_lea.sflag [#allocation4], 1
    %764 = vsyncpa %s763, 1

</llo_original>
